<compile_context>
chip_gen: v7x
topology: tpu7x:2x2x1
jax: 0.10.0
libtpu: 0.0.40
codegen_flags: <defaults>
</compile_context>

<pallas_src>
import jax
import jax.numpy as jnp
from jax import lax
from jax.experimental import pallas as pl
from jax.experimental.pallas import tpu as pltpu


def _round_up(x, m):
    return ((x + m - 1) // m) * m


def _pick_row_tile(n, d, target_bytes=2 * 1024 * 1024):
    """~2 MiB f32 output tile, multiple of 8, capped at 512 and at ceil8(n)."""
    rt = target_bytes // (4 * max(int(d), 1))
    rt = max(8, min(512, int(rt)))
    rt = _round_up(rt, 8)
    rt = min(rt, _round_up(int(n), 8))
    return max(rt, 8)


def _default_table_limit():
    """Generation-aware VMEM budget for keeping the table resident."""
    try:
        cap = int(pltpu.get_tpu_info().vmem_capacity_bytes)
    except Exception:
        cap = 64 * 1024 * 1024  # conservative (v7x-sized) fallback
    # Table is (double-)buffered and shares VMEM with the out tile + one-hot.
    return max(4 * 1024 * 1024, cap // 8)


# ---------------------------------------------------------------------------
# Path 1: small vocab -- table resident in VMEM, one-hot MXU gather per tile.
# ---------------------------------------------------------------------------
def _resident_onehot_kernel(idx_ref, tab_ref, out_ref):
    # idx_ref: VMEM (RT, 1) int32   -- token ids for this tile
    # tab_ref: VMEM (V, D)          -- full table, same block every step
    # out_ref: VMEM (RT, D)         -- lane-dense output tile
    rt = out_ref.shape[0]
    v = tab_ref.shape[0]
    cols = lax.broadcasted_iota(jnp.int32, (rt, v), 1)          # vocab on lanes
    onehot = (cols == idx_ref[...]).astype(tab_ref.dtype)       # (RT, V)
    # HIGHEST precision keeps the f32 selection bit-exact (one nonzero/row).
    out_ref[...] = jnp.dot(
        onehot, tab_ref[...],
        preferred_element_type=jnp.float32,
        precision=lax.Precision.HIGHEST,
    ).astype(out_ref.dtype)


def _embedding_resident(idx_flat, table):
    n = idx_flat.shape[0]
    v, d = table.shape
    # Pad D to a lane-dense multiple of 128 so the MXU output store is
    # unmasked (table is small on this path, so the pad is cheap).
    d_pad = _round_up(d, 128)
    if d_pad != d:
        table = jnp.pad(table, ((0, 0), (0, d_pad - d)))

    rt = _pick_row_tile(n, d_pad)
    n_pad = _round_up(n, rt)
    if n_pad != n:
        idx_flat = jnp.pad(idx_flat, (0, n_pad - n))  # padded rows gather row 0
    idx2 = idx_flat.reshape(n_pad, 1)

    itemsize = table.dtype.itemsize
    vmem_needed = (2 * v * d_pad * itemsize          # (double-)buffered table
                   + 2 * rt * d_pad * itemsize       # double-buffered out tile
                   + rt * v * 4                      # one-hot intermediate
                   + (2 << 20))                      # headroom
    out = pl.pallas_call(
        _resident_onehot_kernel,
        out_shape=jax.ShapeDtypeStruct((n_pad, d_pad), table.dtype),
        grid_spec=pltpu.PrefetchScalarGridSpec(
            num_scalar_prefetch=0,
            grid=(n_pad // rt,),
            in_specs=[
                pl.BlockSpec((rt, 1), lambda t: (t, 0)),       # tile indices
                pl.BlockSpec((v, d_pad), lambda t: (0, 0)),    # resident table
            ],
            out_specs=pl.BlockSpec((rt, d_pad), lambda t: (t, 0)),
        ),
        compiler_params=pltpu.CompilerParams(
            dimension_semantics=("parallel",),
            vmem_limit_bytes=int(max(vmem_needed, 32 * 1024 * 1024)),
        ),
    )(idx2, table)
    return out[:n, :d]


# ---------------------------------------------------------------------------
# Path 2: large vocab -- table in HBM; row_tile concurrent row DMAs per grid
# step, written straight into the output block (no extra VMEM->VMEM pass).
# ---------------------------------------------------------------------------
def _hbm_gather_kernel(idx_ref, tab_hbm, out_ref, sem):
    # idx_ref: SMEM (N_pad,) int32    -- scalar-prefetched token ids
    # tab_hbm: HBM  (V, D)            -- untouched by auto-pipelining (pl.ANY)
    # out_ref: VMEM (RT, D)           -- DMA destination for this tile
    # sem    : single DMA semaphore shared by the RT row copies
    t = pl.program_id(0)
    rt = out_ref.shape[0]
    base = t * rt

    # Issue all RT row gathers first so they are in flight concurrently...
    @pl.loop(0, rt)
    def _issue(r):
        row = idx_ref[base + r]
        pltpu.make_async_copy(
            tab_hbm.at[pl.ds(row, 1), :],
            out_ref.at[pl.ds(r, 1), :],
            sem,
        ).start()

    # ...then drain them (one wait per issued row-sized copy).
    @pl.loop(0, rt)
    def _drain(r):
        row = idx_ref[base + r]
        pltpu.make_async_copy(
            tab_hbm.at[pl.ds(row, 1), :],
            out_ref.at[pl.ds(r, 1), :],
            sem,
        ).wait()


def _embedding_hbm_gather(idx_flat, table):
    n = idx_flat.shape[0]
    v, d = table.shape
    rt = _pick_row_tile(n, d)
    n_pad = _round_up(n, rt)
    if n_pad != n:
        idx_flat = jnp.pad(idx_flat, (0, n_pad - n))  # padded rows gather row 0

    vmem_needed = 2 * rt * d * table.dtype.itemsize + (2 << 20)
    out = pl.pallas_call(
        _hbm_gather_kernel,
        out_shape=jax.ShapeDtypeStruct((n_pad, d), table.dtype),
        grid_spec=pltpu.PrefetchScalarGridSpec(
            num_scalar_prefetch=1,
            grid=(n_pad // rt,),
            in_specs=[pl.BlockSpec(memory_space=pl.ANY)],   # table stays in HBM
            out_specs=pl.BlockSpec((rt, d), lambda t, idx: (t, 0)),
            scratch_shapes=[pltpu.SemaphoreType.DMA],
        ),
        compiler_params=pltpu.CompilerParams(
            dimension_semantics=("parallel",),
            vmem_limit_bytes=int(max(vmem_needed, 32 * 1024 * 1024)),
        ),
    )(idx_flat, table)
    return out[:n]


# ---------------------------------------------------------------------------
# Public wrapper: dispatch on vocab size / table footprint.
# ---------------------------------------------------------------------------
def embedding_forward(indices, table, *, vmem_table_limit_bytes=None,
                      max_onehot_vocab=2048, force_hbm_path=False):
    """indices: (B, S) int32, table: (V, D) float32 -> (B, S, D) float32."""
    b, s = indices.shape
    v, d = table.shape
    # TODO(synk): PyTorch nn.Embedding raises on out-of-range ids; here they
    # are clamped so a bad id can never drive an out-of-bounds DMA/VMEM read.
    idx_flat = jnp.clip(indices.reshape(-1).astype(jnp.int32), 0, v - 1)

    if vmem_table_limit_bytes is None:
        vmem_table_limit_bytes = _default_table_limit()
    table_bytes = int(v) * int(d) * table.dtype.itemsize

    use_resident = (not force_hbm_path
                    and v <= max_onehot_vocab
                    and table_bytes <= vmem_table_limit_bytes)
    if use_resident:
        out = _embedding_resident(idx_flat, table)
    else:
        out = _embedding_hbm_gather(idx_flat, table)
    return out.reshape(b, s, d)


if __name__ == "__main__":
    # Module hyper-parameters (synthetic, deterministic init).
    input_dim = 32       # num_embeddings (vocab size)
    embedding_dim = 256  # embedding width
    batch, seq = 2, 8

    key = jax.random.PRNGKey(0)
    k_tab, k_idx = jax.random.split(key)

    # nn.Embedding default init: weight ~ N(0, 1)
    table = jax.random.normal(k_tab, (input_dim, embedding_dim), dtype=jnp.float32)
    x = jax.random.randint(k_idx, (batch, seq), 0, input_dim, dtype=jnp.int32)

    ref = jnp.take(table, x, axis=0)

    # Path 1: small-vocab VMEM-resident one-hot MXU gather (natural path here).
    out_small = jax.block_until_ready(embedding_forward(x, table))
    assert out_small.shape == (batch, seq, embedding_dim)
    assert jnp.array_equal(out_small, ref), "resident one-hot kernel mismatch"

    # Path 2: force the batched HBM row-gather path (what a 32K+ vocab uses).
    out_hbm = jax.block_until_ready(
        embedding_forward(x, table, force_hbm_path=True))
    assert out_hbm.shape == (batch, seq, embedding_dim)
    assert jnp.array_equal(out_hbm, ref), "HBM batched-gather kernel mismatch"

    print("KERNEL_OK")
</pallas_src>

<mosaic_0001>
module attributes {stable_mosaic.version = 11 : i64} {
  func.func @_resident_onehot_kernel(%arg0: i32, %arg1: memref<16x1xi32, #tpu.memory_space<vmem>>, %arg2: memref<32x256xf32, #tpu.memory_space<vmem>>, %arg3: memref<16x256xf32, #tpu.memory_space<vmem>>) attributes {dimension_semantics = [#tpu.dimension_semantics<parallel>], iteration_bounds = array<i64: 1>, scalar_prefetch = 0 : i64, scratch_operands = 0 : i64, tpu.core_type = #tpu.core_type<tc>, window_params = [{transform_indices = @transform_0, window_bounds = array<i64: 16, 1>}, {pipeline_mode = #tpu.pipeline_mode<synchronous>, transform_indices = @transform_1, window_bounds = array<i64: 32, 256>}, {transform_indices = @transform_2, window_bounds = array<i64: 16, 256>}]} {
    %0 = tpu.iota {dimensions = array<i32: 1>} : vector<16x32xi32>
    %c0 = arith.constant 0 : index
    %c0_0 = arith.constant 0 : index
    %1 = vector.load %arg1[%c0, %c0_0] : memref<16x1xi32, #tpu.memory_space<vmem>>, vector<16x1xi32>
    %2 = vector.broadcast %1 : vector<16x1xi32> to vector<16x32xi32>
    %3 = arith.cmpi eq, %0, %2 : vector<16x32xi32>
    %4 = arith.extui %3 : vector<16x32xi1> to vector<16x32xi32>
    %5 = arith.sitofp %4 : vector<16x32xi32> to vector<16x32xf32>
    %c0_1 = arith.constant 0 : index
    %c0_2 = arith.constant 0 : index
    %6 = vector.load %arg2[%c0_1, %c0_2] : memref<32x256xf32, #tpu.memory_space<vmem>>, vector<32x256xf32>
    %cst = arith.constant dense<0.000000e+00> : vector<16x256xf32>
    %7 = tpu.matmul %5, %6, %cst {dimension_numbers = #tpu.dot_dimension_numbers<[1], [0], [0], [1], [0, 0, 1, 1], [], []>, precision = #tpu.contract_precision<fp32>} : vector<16x32xf32>, vector<32x256xf32>, vector<16x256xf32> -> vector<16x256xf32>
    %c0_3 = arith.constant 0 : index
    %c0_4 = arith.constant 0 : index
    %8 = vector.load %arg3[%c0_3, %c0_4] : memref<16x256xf32, #tpu.memory_space<vmem>>, vector<16x256xf32>
    tpu.vector_store %arg3[%c0_3, %c0_4], %7 {strides = array<i32>} : memref<16x256xf32, #tpu.memory_space<vmem>>, vector<16x256xf32>,
    return
  }
  func.func @transform_0(%arg0: i32) -> (i32, i32) {
    %c0_i32 = arith.constant 0 : i32
    %c0_i32_0 = arith.constant 0 : i32
    return %arg0, %c0_i32 : i32, i32
  }
  func.func @transform_1(%arg0: i32) -> (i32, i32) {
    %c0_i32 = arith.constant 0 : i32
    %c0_i32_0 = arith.constant 0 : i32
    %c0_i32_1 = arith.constant 0 : i32
    return %c0_i32, %c0_i32_0 : i32, i32
  }
  func.func @transform_2(%arg0: i32) -> (i32, i32) {
    %c0_i32 = arith.constant 0 : i32
    %c0_i32_0 = arith.constant 0 : i32
    return %arg0, %c0_i32 : i32, i32
  }
}

</mosaic_0001>

<llo_original>
// kernel: tpu_custom_call.1
$region0: #{tpu_custom_call.1}
  #allocation0 [shape = 'u32[]', space=smem, size = 0x4, offset = 0x4, fixed_abs, tag = 'smem constant byte address 0x4 - core index']
  #allocation1 [shape = 'u32[144,128]{1,0:T(1,128)}', space=vmem, size = 0x12000, scoped, tag = 'internal scratch']
  %s0 = inlined_call_operand.vmem [shape: s32[16,1], index: 0, kind: input, shape index: {}]
  %s1 = inlined_call_operand.hbm [shape: f32[32,256], index: 1, kind: input, shape index: {}]
  %s2 = inlined_call_operand.hbm [shape: f32[16,256], index: 2, kind: output, shape index: {}]
  %s3 = sld [smem:[#allocation0]]
  $region22: #{tpu_custom_call.1} parent=0
    _
  %s5 = ssub.s32 1, %s3
  %s6 = scalar_select 0, %s5, %s3
  $region1: #{tpu_custom_call.1} parent=0
    #allocation2 [shape = 'u8[32768]{0}', space=vmem, size = 0x8000, scoped, tag = 'input window, operand 1, single buffered']
    #allocation3 [shape = 's32[1]{0}', space=sflag, size = 0x4, scoped, tag = 'scoped memory for tpu_custom_call.1']
    #allocation4 [shape = 's32[1]{0}', space=sflag, size = 0x4, scoped, tag = 'scoped memory for tpu_custom_call.1']
    #allocation5 [shape = 'u8[16384]{0}', space=vmem, size = 0x4000, scoped, tag = 'output window, operand 0, single buffered']
    %7 = vsyncpa [#allocation3], 0
    %8 = vsyncpa [#allocation4], 0
    // Predicated region
    $region2: #{tpu_custom_call.1} parent=1 // pred_check
      _
    $region3: #{tpu_custom_call.1} parent=1 // pred_check_branch
      %10 = sbr.rel (0) target = $region5
    $region4: #{tpu_custom_call.1} parent=1 // pred_region
      _
    $region5: #{tpu_custom_call.1} parent=1 // pred_fallthru
      _
    // Predicated region
    $region6: #{tpu_custom_call.1} parent=1 // pred_check
      _
    $region7: #{tpu_custom_call.1} parent=1 // pred_check_branch
      %12 = sbr.rel (0) target = $region9
    $region8: #{tpu_custom_call.1} parent=1 // pred_region
      %s14 = ssub.s32 1024, 1024
      %15 = vsyncadd [#allocation3], %s14
      %s16 = sshll.u32 [#allocation2], 4
      %s17 = int_to_ptr.vmem [resolvable:$true] %s16
      %22 = dma.hbm_to_vmem [thread:$0]  %s1, 1024, %s17, [#allocation3], 256, 256, 16
    $region9: #{tpu_custom_call.1} parent=1 // pred_fallthru
      _
    // Predicated region
    $region10: #{tpu_custom_call.1} parent=1 // pred_check
      _
    $region11: #{tpu_custom_call.1} parent=1 // pred_check_branch
      %24 = sbr.rel (0) target = $region13
    $region12: #{tpu_custom_call.1} parent=1 // pred_region
      %25 = dma.done [#allocation3], 1024
    $region13: #{tpu_custom_call.1} parent=1 // pred_fallthru
      _
    %v26 = vlaneseq
    %v27 = vand.u32 %v26, 127
    %v28 = vld [vmem:[%s0] sm:$0xff]
    %v29 = vld [vmem:[%s0 + $0x8] sm:$0xff]
    %30 = vset.pattern.permute.xlu0 0
    %31 = vperm.xlu0 %30, %v28
    %v32 = vpop.permute.xlu0 %31
    %33 = vset.pattern.permute.xlu0 0
    %34 = vperm.xlu0 %33, %v29
    %v35 = vpop.permute.xlu0 %34
    %vm36 = vcmp.eq.s32.totalorder %v27, %v32
    %vm37 = vcmp.eq.s32.totalorder %v27, %v35
    %v38 = vsel %vm36, 1, 0
    %v39 = vsel %vm37, 1, 0
    %v40 = vcvt.s32.f32 %v38
    %v41 = vcvt.s32.f32 %v39
    %v42 = vld [vmem:[#allocation2] sm:$0xff]
    %v43 = vld [vmem:[#allocation2 + $0x8] sm:$0xff]
    %v44 = vld [vmem:[#allocation2 + $0x10] sm:$0xff]
    %v45 = vld [vmem:[#allocation2 + $0x18] sm:$0xff]
    %v46 = vld [vmem:[#allocation2 + $0x20] sm:$0xff]
    %v47 = vld [vmem:[#allocation2 + $0x28] sm:$0xff]
    %v48 = vld [vmem:[#allocation2 + $0x30] sm:$0xff]
    %v49 = vld [vmem:[#allocation2 + $0x38] sm:$0xff]
    %vm50 = vcmask 261120
    %v52 = vsel %vm50, %v40, 0
    %v55 = vsel %vm50, %v41, 0
    %v57 = vand.u32 %v43, 4294901760
    %58 = vmatprep.subr.mxu0 %v57
    %v59 = vand.u32 %v42, 4294901760
    %60 = vmatpush1.msra.mxu0 %v59
    %v61 = vand.u32 %v45, 4294901760
    %62 = vmatprep.subr.mxu0 %v61
    %v63 = vand.u32 %v44, 4294901760
    %64 = vmatpush1.msra.mxu0 %v63
    %v65 = vand.u32 %v47, 4294901760
    %66 = vmatprep.subr.mxu0 %v65
    %v67 = vand.u32 %v46, 4294901760
    %68 = vmatpush1.msra.mxu0 %v67
    %v69 = vand.u32 %v49, 4294901760
    %70 = vmatprep.subr.mxu0 %v69
    %v71 = vand.u32 %v48, 4294901760
    %72 = vmatpush1.msra.mxu0 %v71
    %73 = vmatprep.subr.mxu0 0.0
    %74 = vmatpush1.msra.mxu0 0.0
    %75 = vmatprep.subr.mxu0 0.0
    %76 = vmatpush1.msra.mxu0 0.0
    %77 = vmatprep.subr.mxu0 0.0
    %78 = vmatpush1.msra.mxu0 0.0
    %79 = vmatprep.subr.mxu0 0.0
    %80 = vmatpush1.msra.mxu0 0.0
    %81 = vmatprep.subr.mxu0 0.0
    %82 = vmatpush1.msra.mxu0 0.0
    %83 = vmatprep.subr.mxu0 0.0
    %84 = vmatpush1.msra.mxu0 0.0
    %85 = vmatprep.subr.mxu0 0.0
    %86 = vmatpush1.msra.mxu0 0.0
    %87 = vmatprep.subr.mxu0 0.0
    %88 = vmatpush1.msra.mxu0 0.0
    %89 = vmatprep.subr.mxu0 0.0
    %90 = vmatpush1.msra.mxu0 0.0
    %91 = vmatprep.subr.mxu0 0.0
    %92 = vmatpush1.msra.mxu0 0.0
    %93 = vmatprep.subr.mxu0 0.0
    %94 = vmatpush1.msra.mxu0 0.0
    %95 = vmatprep.subr.mxu0 0.0
    %96 = vmatpush1.msra.mxu0 0.0
    %97 = vmatprep.subr.mxu0 0.0
    %98 = vmatpush1.msra.mxu0 0.0
    %99 = vmatprep.subr.mxu0 0.0
    %100 = vmatpush1.msra.mxu0 0.0
    %101 = vmatprep.subr.mxu0 0.0
    %102 = vmatpush1.msra.mxu0 0.0
    %103 = vmatprep.subr.mxu0 0.0
    %104 = vmatpush1.msra.mxu0 0.0
    %105 = vmatprep.subr.mxu0 0.0
    %106 = vmatpush1.msra.mxu0 0.0
    %107 = vmatprep.subr.mxu0 0.0
    %108 = vmatpush1.msra.mxu0 0.0
    %109 = vmatprep.subr.mxu0 0.0
    %110 = vmatpush1.msra.mxu0 0.0
    %111 = vmatprep.subr.mxu0 0.0
    %112 = vmatpush1.msra.mxu0 0.0
    %113 = vmatprep.subr.mxu0 0.0
    %114 = vmatpush1.msra.mxu0 0.0
    %115 = vmatprep.subr.mxu0 0.0
    %116 = vmatpush1.msra.mxu0 0.0
    %117 = vmatprep.subr.mxu0 0.0
    %118 = vmatpush1.msra.mxu0 0.0
    %119 = vmatprep.subr.mxu0 0.0
    %120 = vmatpush1.msra.mxu0 0.0
    %121 = vmatprep.subr.mxu0 0.0
    %122 = vmatpush1.msra.mxu0 0.0
    %123 = vmatprep.subr.mxu0 0.0
    %124 = vmatpush1.msra.mxu0 0.0
    %125 = vmatprep.subr.mxu0 0.0
    %126 = vmatpush1.msra.mxu0 0.0
    %127 = vmatprep.subr.mxu0 0.0
    %128 = vmatpush1.msra.mxu0 0.0
    %129 = vmatprep.mubr.f32.mxu0 0.0
    %v130 = vand.u32 %v52, 4294901760
    %v131 = vsub.f32 %v52, %v130
    %v132 = vand.u32 %v131, 4294901760
    %v133 = vsub.f32 %v131, %v132
    %v134 = vand.u32 %v133, 4294901760
    %135 = vmatmul.mubr.f32.gmra.mrb[0].mxu0 %v134
    %v136 = vpop.f32.mrb[0].mxu0
    %v137 = vadd.f32 0.0, %v136
    %v138 = vpop.f32.mrb[0].mxu0
    %v139 = vadd.f32 0.0, %v138
    %140 = vmatprep.mubr.f32.mxu0 0.0
    %v141 = vand.u32 %v55, 4294901760
    %v142 = vsub.f32 %v55, %v141
    %v143 = vand.u32 %v142, 4294901760
    %v144 = vsub.f32 %v142, %v143
    %v145 = vand.u32 %v144, 4294901760
    %146 = vmatmul.mubr.f32.gmra.mrb[0].mxu0 %v145
    %v147 = vpop.f32.mrb[0].mxu0
    %v148 = vadd.f32 0.0, %v147
    %v149 = vpop.f32.mrb[0].mxu0
    %v150 = vadd.f32 0.0, %v149
    %151 = vdwg.mxu0
    %v152 = vand.u32 %v43, 4294901760
    %v153 = vsub.f32 %v43, %v152
    %v154 = vand.u32 %v153, 4294901760
    %v155 = vsub.f32 %v153, %v154
    %v156 = vand.u32 %v155, 4294901760
    %157 = vmatprep.subr.mxu0 %v156
    %v158 = vand.u32 %v42, 4294901760
    %v159 = vsub.f32 %v42, %v158
    %v160 = vand.u32 %v159, 4294901760
    %v161 = vsub.f32 %v159, %v160
    %v162 = vand.u32 %v161, 4294901760
    %163 = vmatpush1.msra.mxu0 %v162
    %v164 = vand.u32 %v45, 4294901760
    %v165 = vsub.f32 %v45, %v164
    %v166 = vand.u32 %v165, 4294901760
    %v167 = vsub.f32 %v165, %v166
    %v168 = vand.u32 %v167, 4294901760
    %169 = vmatprep.subr.mxu0 %v168
    %v170 = vand.u32 %v44, 4294901760
    %v171 = vsub.f32 %v44, %v170
    %v172 = vand.u32 %v171, 4294901760
    %v173 = vsub.f32 %v171, %v172
    %v174 = vand.u32 %v173, 4294901760
    %175 = vmatpush1.msra.mxu0 %v174
    %v176 = vand.u32 %v47, 4294901760
    %v177 = vsub.f32 %v47, %v176
    %v178 = vand.u32 %v177, 4294901760
    %v179 = vsub.f32 %v177, %v178
    %v180 = vand.u32 %v179, 4294901760
    %181 = vmatprep.subr.mxu0 %v180
    %v182 = vand.u32 %v46, 4294901760
    %v183 = vsub.f32 %v46, %v182
    %v184 = vand.u32 %v183, 4294901760
    %v185 = vsub.f32 %v183, %v184
    %v186 = vand.u32 %v185, 4294901760
    %187 = vmatpush1.msra.mxu0 %v186
    %v188 = vand.u32 %v49, 4294901760
    %v189 = vsub.f32 %v49, %v188
    %v190 = vand.u32 %v189, 4294901760
    %v191 = vsub.f32 %v189, %v190
    %v192 = vand.u32 %v191, 4294901760
    %193 = vmatprep.subr.mxu0 %v192
    %v194 = vand.u32 %v48, 4294901760
    %v195 = vsub.f32 %v48, %v194
    %v196 = vand.u32 %v195, 4294901760
    %v197 = vsub.f32 %v195, %v196
    %v198 = vand.u32 %v197, 4294901760
    %199 = vmatpush1.msra.mxu0 %v198
    %200 = vmatprep.subr.mxu0 0.0
    %201 = vmatpush1.msra.mxu0 0.0
    %202 = vmatprep.subr.mxu0 0.0
    %203 = vmatpush1.msra.mxu0 0.0
    %204 = vmatprep.subr.mxu0 0.0
    %205 = vmatpush1.msra.mxu0 0.0
    %206 = vmatprep.subr.mxu0 0.0
    %207 = vmatpush1.msra.mxu0 0.0
    %208 = vmatprep.subr.mxu0 0.0
    %209 = vmatpush1.msra.mxu0 0.0
    %210 = vmatprep.subr.mxu0 0.0
    %211 = vmatpush1.msra.mxu0 0.0
    %212 = vmatprep.subr.mxu0 0.0
    %213 = vmatpush1.msra.mxu0 0.0
    %214 = vmatprep.subr.mxu0 0.0
    %215 = vmatpush1.msra.mxu0 0.0
    %216 = vmatprep.subr.mxu0 0.0
    %217 = vmatpush1.msra.mxu0 0.0
    %218 = vmatprep.subr.mxu0 0.0
    %219 = vmatpush1.msra.mxu0 0.0
    %220 = vmatprep.subr.mxu0 0.0
    %221 = vmatpush1.msra.mxu0 0.0
    %222 = vmatprep.subr.mxu0 0.0
    %223 = vmatpush1.msra.mxu0 0.0
    %224 = vmatprep.subr.mxu0 0.0
    %225 = vmatpush1.msra.mxu0 0.0
    %226 = vmatprep.subr.mxu0 0.0
    %227 = vmatpush1.msra.mxu0 0.0
    %228 = vmatprep.subr.mxu0 0.0
    %229 = vmatpush1.msra.mxu0 0.0
    %230 = vmatprep.subr.mxu0 0.0
    %231 = vmatpush1.msra.mxu0 0.0
    %232 = vmatprep.subr.mxu0 0.0
    %233 = vmatpush1.msra.mxu0 0.0
    %234 = vmatprep.subr.mxu0 0.0
    %235 = vmatpush1.msra.mxu0 0.0
    %236 = vmatprep.subr.mxu0 0.0
    %237 = vmatpush1.msra.mxu0 0.0
    %238 = vmatprep.subr.mxu0 0.0
    %239 = vmatpush1.msra.mxu0 0.0
    %240 = vmatprep.subr.mxu0 0.0
    %241 = vmatpush1.msra.mxu0 0.0
    %242 = vmatprep.subr.mxu0 0.0
    %243 = vmatpush1.msra.mxu0 0.0
    %244 = vmatprep.subr.mxu0 0.0
    %245 = vmatpush1.msra.mxu0 0.0
    %246 = vmatprep.subr.mxu0 0.0
    %247 = vmatpush1.msra.mxu0 0.0
    %248 = vmatprep.subr.mxu0 0.0
    %249 = vmatpush1.msra.mxu0 0.0
    %250 = vmatprep.subr.mxu0 0.0
    %251 = vmatpush1.msra.mxu0 0.0
    %252 = vmatprep.subr.mxu0 0.0
    %253 = vmatpush1.msra.mxu0 0.0
    %254 = vmatprep.subr.mxu0 0.0
    %255 = vmatpush1.msra.mxu0 0.0
    %256 = vmatprep.mubr.f32.mxu0 0.0
    %v257 = vand.u32 %v52, 4294901760
    %258 = vmatmul.mubr.f32.gmra.mrb[0].mxu0 %v257
    %v259 = vpop.f32.mrb[0].mxu0
    %v260 = vadd.f32 %v137, %v259
    %v261 = vpop.f32.mrb[0].mxu0
    %v262 = vadd.f32 %v139, %v261
    %263 = vmatprep.mubr.f32.mxu0 0.0
    %v264 = vand.u32 %v55, 4294901760
    %265 = vmatmul.mubr.f32.gmra.mrb[0].mxu0 %v264
    %v266 = vpop.f32.mrb[0].mxu0
    %v267 = vadd.f32 %v148, %v266
    %v268 = vpop.f32.mrb[0].mxu0
    %v269 = vadd.f32 %v150, %v268
    %270 = vdwg.mxu0
    %v271 = vand.u32 %v43, 4294901760
    %v272 = vsub.f32 %v43, %v271
    %273 = vmatprep.subr.mxu0 %v272
    %v274 = vand.u32 %v42, 4294901760
    %v275 = vsub.f32 %v42, %v274
    %276 = vmatpush1.msra.mxu0 %v275
    %v277 = vand.u32 %v45, 4294901760
    %v278 = vsub.f32 %v45, %v277
    %279 = vmatprep.subr.mxu0 %v278
    %v280 = vand.u32 %v44, 4294901760
    %v281 = vsub.f32 %v44, %v280
    %282 = vmatpush1.msra.mxu0 %v281
    %v283 = vand.u32 %v47, 4294901760
    %v284 = vsub.f32 %v47, %v283
    %285 = vmatprep.subr.mxu0 %v284
    %v286 = vand.u32 %v46, 4294901760
    %v287 = vsub.f32 %v46, %v286
    %288 = vmatpush1.msra.mxu0 %v287
    %v289 = vand.u32 %v49, 4294901760
    %v290 = vsub.f32 %v49, %v289
    %291 = vmatprep.subr.mxu0 %v290
    %v292 = vand.u32 %v48, 4294901760
    %v293 = vsub.f32 %v48, %v292
    %294 = vmatpush1.msra.mxu0 %v293
    %295 = vmatprep.subr.mxu0 0.0
    %296 = vmatpush1.msra.mxu0 0.0
    %297 = vmatprep.subr.mxu0 0.0
    %298 = vmatpush1.msra.mxu0 0.0
    %299 = vmatprep.subr.mxu0 0.0
    %300 = vmatpush1.msra.mxu0 0.0
    %301 = vmatprep.subr.mxu0 0.0
    %302 = vmatpush1.msra.mxu0 0.0
    %303 = vmatprep.subr.mxu0 0.0
    %304 = vmatpush1.msra.mxu0 0.0
    %305 = vmatprep.subr.mxu0 0.0
    %306 = vmatpush1.msra.mxu0 0.0
    %307 = vmatprep.subr.mxu0 0.0
    %308 = vmatpush1.msra.mxu0 0.0
    %309 = vmatprep.subr.mxu0 0.0
    %310 = vmatpush1.msra.mxu0 0.0
    %311 = vmatprep.subr.mxu0 0.0
    %312 = vmatpush1.msra.mxu0 0.0
    %313 = vmatprep.subr.mxu0 0.0
    %314 = vmatpush1.msra.mxu0 0.0
    %315 = vmatprep.subr.mxu0 0.0
    %316 = vmatpush1.msra.mxu0 0.0
    %317 = vmatprep.subr.mxu0 0.0
    %318 = vmatpush1.msra.mxu0 0.0
    %319 = vmatprep.subr.mxu0 0.0
    %320 = vmatpush1.msra.mxu0 0.0
    %321 = vmatprep.subr.mxu0 0.0
    %322 = vmatpush1.msra.mxu0 0.0
    %323 = vmatprep.subr.mxu0 0.0
    %324 = vmatpush1.msra.mxu0 0.0
    %325 = vmatprep.subr.mxu0 0.0
    %326 = vmatpush1.msra.mxu0 0.0
    %327 = vmatprep.subr.mxu0 0.0
    %328 = vmatpush1.msra.mxu0 0.0
    %329 = vmatprep.subr.mxu0 0.0
    %330 = vmatpush1.msra.mxu0 0.0
    %331 = vmatprep.subr.mxu0 0.0
    %332 = vmatpush1.msra.mxu0 0.0
    %333 = vmatprep.subr.mxu0 0.0
    %334 = vmatpush1.msra.mxu0 0.0
    %335 = vmatprep.subr.mxu0 0.0
    %336 = vmatpush1.msra.mxu0 0.0
    %337 = vmatprep.subr.mxu0 0.0
    %338 = vmatpush1.msra.mxu0 0.0
    %339 = vmatprep.subr.mxu0 0.0
    %340 = vmatpush1.msra.mxu0 0.0
    %341 = vmatprep.subr.mxu0 0.0
    %342 = vmatpush1.msra.mxu0 0.0
    %343 = vmatprep.subr.mxu0 0.0
    %344 = vmatpush1.msra.mxu0 0.0
    %345 = vmatprep.subr.mxu0 0.0
    %346 = vmatpush1.msra.mxu0 0.0
    %347 = vmatprep.subr.mxu0 0.0
    %348 = vmatpush1.msra.mxu0 0.0
    %349 = vmatprep.subr.mxu0 0.0
    %350 = vmatpush1.msra.mxu0 0.0
    %351 = vmatprep.mubr.f32.mxu0 0.0
    %v352 = vand.u32 %v52, 4294901760
    %v353 = vsub.f32 %v52, %v352
    %354 = vmatmul.mubr.f32.gmra.mrb[0].mxu0 %v353
    %v355 = vpop.f32.mrb[0].mxu0
    %v356 = vadd.f32 %v260, %v355
    %v357 = vpop.f32.mrb[0].mxu0
    %v358 = vadd.f32 %v262, %v357
    %359 = vmatprep.mubr.f32.mxu0 0.0
    %v360 = vand.u32 %v55, 4294901760
    %v361 = vsub.f32 %v55, %v360
    %362 = vmatmul.mubr.f32.gmra.mrb[0].mxu0 %v361
    %v363 = vpop.f32.mrb[0].mxu0
    %v364 = vadd.f32 %v267, %v363
    %v365 = vpop.f32.mrb[0].mxu0
    %v366 = vadd.f32 %v269, %v365
    %367 = vdwg.mxu0
    %v368 = vand.u32 %v43, 4294901760
    %369 = vmatprep.subr.mxu0 %v368
    %v370 = vand.u32 %v42, 4294901760
    %371 = vmatpush1.msra.mxu0 %v370
    %v372 = vand.u32 %v45, 4294901760
    %373 = vmatprep.subr.mxu0 %v372
    %v374 = vand.u32 %v44, 4294901760
    %375 = vmatpush1.msra.mxu0 %v374
    %v376 = vand.u32 %v47, 4294901760
    %377 = vmatprep.subr.mxu0 %v376
    %v378 = vand.u32 %v46, 4294901760
    %379 = vmatpush1.msra.mxu0 %v378
    %v380 = vand.u32 %v49, 4294901760
    %381 = vmatprep.subr.mxu0 %v380
    %v382 = vand.u32 %v48, 4294901760
    %383 = vmatpush1.msra.mxu0 %v382
    %384 = vmatprep.subr.mxu0 0.0
    %385 = vmatpush1.msra.mxu0 0.0
    %386 = vmatprep.subr.mxu0 0.0
    %387 = vmatpush1.msra.mxu0 0.0
    %388 = vmatprep.subr.mxu0 0.0
    %389 = vmatpush1.msra.mxu0 0.0
    %390 = vmatprep.subr.mxu0 0.0
    %391 = vmatpush1.msra.mxu0 0.0
    %392 = vmatprep.subr.mxu0 0.0
    %393 = vmatpush1.msra.mxu0 0.0
    %394 = vmatprep.subr.mxu0 0.0
    %395 = vmatpush1.msra.mxu0 0.0
    %396 = vmatprep.subr.mxu0 0.0
    %397 = vmatpush1.msra.mxu0 0.0
    %398 = vmatprep.subr.mxu0 0.0
    %399 = vmatpush1.msra.mxu0 0.0
    %400 = vmatprep.subr.mxu0 0.0
    %401 = vmatpush1.msra.mxu0 0.0
    %402 = vmatprep.subr.mxu0 0.0
    %403 = vmatpush1.msra.mxu0 0.0
    %404 = vmatprep.subr.mxu0 0.0
    %405 = vmatpush1.msra.mxu0 0.0
    %406 = vmatprep.subr.mxu0 0.0
    %407 = vmatpush1.msra.mxu0 0.0
    %408 = vmatprep.subr.mxu0 0.0
    %409 = vmatpush1.msra.mxu0 0.0
    %410 = vmatprep.subr.mxu0 0.0
    %411 = vmatpush1.msra.mxu0 0.0
    %412 = vmatprep.subr.mxu0 0.0
    %413 = vmatpush1.msra.mxu0 0.0
    %414 = vmatprep.subr.mxu0 0.0
    %415 = vmatpush1.msra.mxu0 0.0
    %416 = vmatprep.subr.mxu0 0.0
    %417 = vmatpush1.msra.mxu0 0.0
    %418 = vmatprep.subr.mxu0 0.0
    %419 = vmatpush1.msra.mxu0 0.0
    %420 = vmatprep.subr.mxu0 0.0
    %421 = vmatpush1.msra.mxu0 0.0
    %422 = vmatprep.subr.mxu0 0.0
    %423 = vmatpush1.msra.mxu0 0.0
    %424 = vmatprep.subr.mxu0 0.0
    %425 = vmatpush1.msra.mxu0 0.0
    %426 = vmatprep.subr.mxu0 0.0
    %427 = vmatpush1.msra.mxu0 0.0
    %428 = vmatprep.subr.mxu0 0.0
    %429 = vmatpush1.msra.mxu0 0.0
    %430 = vmatprep.subr.mxu0 0.0
    %431 = vmatpush1.msra.mxu0 0.0
    %432 = vmatprep.subr.mxu0 0.0
    %433 = vmatpush1.msra.mxu0 0.0
    %434 = vmatprep.subr.mxu0 0.0
    %435 = vmatpush1.msra.mxu0 0.0
    %436 = vmatprep.subr.mxu0 0.0
    %437 = vmatpush1.msra.mxu0 0.0
    %438 = vmatprep.subr.mxu0 0.0
    %439 = vmatpush1.msra.mxu0 0.0
    %440 = vmatprep.mubr.f32.mxu0 0.0
    %v441 = vand.u32 %v52, 4294901760
    %v442 = vsub.f32 %v52, %v441
    %v443 = vand.u32 %v442, 4294901760
    %444 = vmatmul.mubr.f32.gmra.mrb[0].mxu0 %v443
    %v445 = vpop.f32.mrb[0].mxu0
    %v446 = vadd.f32 %v356, %v445
    %v447 = vpop.f32.mrb[0].mxu0
    %v448 = vadd.f32 %v358, %v447
    %449 = vmatprep.mubr.f32.mxu0 0.0
    %v450 = vand.u32 %v55, 4294901760
    %v451 = vsub.f32 %v55, %v450
    %v452 = vand.u32 %v451, 4294901760
    %453 = vmatmul.mubr.f32.gmra.mrb[0].mxu0 %v452
    %v454 = vpop.f32.mrb[0].mxu0
    %v455 = vadd.f32 %v364, %v454
    %v456 = vpop.f32.mrb[0].mxu0
    %v457 = vadd.f32 %v366, %v456
    %458 = vdwg.mxu0
    %v459 = vand.u32 %v43, 4294901760
    %v460 = vsub.f32 %v43, %v459
    %v461 = vand.u32 %v460, 4294901760
    %462 = vmatprep.subr.mxu0 %v461
    %v463 = vand.u32 %v42, 4294901760
    %v464 = vsub.f32 %v42, %v463
    %v465 = vand.u32 %v464, 4294901760
    %466 = vmatpush1.msra.mxu0 %v465
    %v467 = vand.u32 %v45, 4294901760
    %v468 = vsub.f32 %v45, %v467
    %v469 = vand.u32 %v468, 4294901760
    %470 = vmatprep.subr.mxu0 %v469
    %v471 = vand.u32 %v44, 4294901760
    %v472 = vsub.f32 %v44, %v471
    %v473 = vand.u32 %v472, 4294901760
    %474 = vmatpush1.msra.mxu0 %v473
    %v475 = vand.u32 %v47, 4294901760
    %v476 = vsub.f32 %v47, %v475
    %v477 = vand.u32 %v476, 4294901760
    %478 = vmatprep.subr.mxu0 %v477
    %v479 = vand.u32 %v46, 4294901760
    %v480 = vsub.f32 %v46, %v479
    %v481 = vand.u32 %v480, 4294901760
    %482 = vmatpush1.msra.mxu0 %v481
    %v483 = vand.u32 %v49, 4294901760
    %v484 = vsub.f32 %v49, %v483
    %v485 = vand.u32 %v484, 4294901760
    %486 = vmatprep.subr.mxu0 %v485
    %v487 = vand.u32 %v48, 4294901760
    %v488 = vsub.f32 %v48, %v487
    %v489 = vand.u32 %v488, 4294901760
    %490 = vmatpush1.msra.mxu0 %v489
    %491 = vmatprep.subr.mxu0 0.0
    %492 = vmatpush1.msra.mxu0 0.0
    %493 = vmatprep.subr.mxu0 0.0
    %494 = vmatpush1.msra.mxu0 0.0
    %495 = vmatprep.subr.mxu0 0.0
    %496 = vmatpush1.msra.mxu0 0.0
    %497 = vmatprep.subr.mxu0 0.0
    %498 = vmatpush1.msra.mxu0 0.0
    %499 = vmatprep.subr.mxu0 0.0
    %500 = vmatpush1.msra.mxu0 0.0
    %501 = vmatprep.subr.mxu0 0.0
    %502 = vmatpush1.msra.mxu0 0.0
    %503 = vmatprep.subr.mxu0 0.0
    %504 = vmatpush1.msra.mxu0 0.0
    %505 = vmatprep.subr.mxu0 0.0
    %506 = vmatpush1.msra.mxu0 0.0
    %507 = vmatprep.subr.mxu0 0.0
    %508 = vmatpush1.msra.mxu0 0.0
    %509 = vmatprep.subr.mxu0 0.0
    %510 = vmatpush1.msra.mxu0 0.0
    %511 = vmatprep.subr.mxu0 0.0
    %512 = vmatpush1.msra.mxu0 0.0
    %513 = vmatprep.subr.mxu0 0.0
    %514 = vmatpush1.msra.mxu0 0.0
    %515 = vmatprep.subr.mxu0 0.0
    %516 = vmatpush1.msra.mxu0 0.0
    %517 = vmatprep.subr.mxu0 0.0
    %518 = vmatpush1.msra.mxu0 0.0
    %519 = vmatprep.subr.mxu0 0.0
    %520 = vmatpush1.msra.mxu0 0.0
    %521 = vmatprep.subr.mxu0 0.0
    %522 = vmatpush1.msra.mxu0 0.0
    %523 = vmatprep.subr.mxu0 0.0
    %524 = vmatpush1.msra.mxu0 0.0
    %525 = vmatprep.subr.mxu0 0.0
    %526 = vmatpush1.msra.mxu0 0.0
    %527 = vmatprep.subr.mxu0 0.0
    %528 = vmatpush1.msra.mxu0 0.0
    %529 = vmatprep.subr.mxu0 0.0
    %530 = vmatpush1.msra.mxu0 0.0
    %531 = vmatprep.subr.mxu0 0.0
    %532 = vmatpush1.msra.mxu0 0.0
    %533 = vmatprep.subr.mxu0 0.0
    %534 = vmatpush1.msra.mxu0 0.0
    %535 = vmatprep.subr.mxu0 0.0
    %536 = vmatpush1.msra.mxu0 0.0
    %537 = vmatprep.subr.mxu0 0.0
    %538 = vmatpush1.msra.mxu0 0.0
    %539 = vmatprep.subr.mxu0 0.0
    %540 = vmatpush1.msra.mxu0 0.0
    %541 = vmatprep.subr.mxu0 0.0
    %542 = vmatpush1.msra.mxu0 0.0
    %543 = vmatprep.subr.mxu0 0.0
    %544 = vmatpush1.msra.mxu0 0.0
    %545 = vmatprep.subr.mxu0 0.0
    %546 = vmatpush1.msra.mxu0 0.0
    %547 = vmatprep.mubr.f32.mxu0 0.0
    %v548 = vand.u32 %v52, 4294901760
    %549 = vmatmul.mubr.f32.gmra.mrb[0].mxu0 %v548
    %v550 = vpop.f32.mrb[0].mxu0
    %v551 = vadd.f32 %v446, %v550
    %v552 = vpop.f32.mrb[0].mxu0
    %v553 = vadd.f32 %v448, %v552
    %554 = vmatprep.mubr.f32.mxu0 0.0
    %v555 = vand.u32 %v55, 4294901760
    %556 = vmatmul.mubr.f32.gmra.mrb[0].mxu0 %v555
    %v557 = vpop.f32.mrb[0].mxu0
    %v558 = vadd.f32 %v455, %v557
    %v559 = vpop.f32.mrb[0].mxu0
    %v560 = vadd.f32 %v457, %v559
    %561 = vdwg.mxu0
    %v562 = vand.u32 %v43, 4294901760
    %563 = vmatprep.subr.mxu0 %v562
    %v564 = vand.u32 %v42, 4294901760
    %565 = vmatpush1.msra.mxu0 %v564
    %v566 = vand.u32 %v45, 4294901760
    %567 = vmatprep.subr.mxu0 %v566
    %v568 = vand.u32 %v44, 4294901760
    %569 = vmatpush1.msra.mxu0 %v568
    %v570 = vand.u32 %v47, 4294901760
    %571 = vmatprep.subr.mxu0 %v570
    %v572 = vand.u32 %v46, 4294901760
    %573 = vmatpush1.msra.mxu0 %v572
    %v574 = vand.u32 %v49, 4294901760
    %575 = vmatprep.subr.mxu0 %v574
    %v576 = vand.u32 %v48, 4294901760
    %577 = vmatpush1.msra.mxu0 %v576
    %578 = vmatprep.subr.mxu0 0.0
    %579 = vmatpush1.msra.mxu0 0.0
    %580 = vmatprep.subr.mxu0 0.0
    %581 = vmatpush1.msra.mxu0 0.0
    %582 = vmatprep.subr.mxu0 0.0
    %583 = vmatpush1.msra.mxu0 0.0
    %584 = vmatprep.subr.mxu0 0.0
    %585 = vmatpush1.msra.mxu0 0.0
    %586 = vmatprep.subr.mxu0 0.0
    %587 = vmatpush1.msra.mxu0 0.0
    %588 = vmatprep.subr.mxu0 0.0
    %589 = vmatpush1.msra.mxu0 0.0
    %590 = vmatprep.subr.mxu0 0.0
    %591 = vmatpush1.msra.mxu0 0.0
    %592 = vmatprep.subr.mxu0 0.0
    %593 = vmatpush1.msra.mxu0 0.0
    %594 = vmatprep.subr.mxu0 0.0
    %595 = vmatpush1.msra.mxu0 0.0
    %596 = vmatprep.subr.mxu0 0.0
    %597 = vmatpush1.msra.mxu0 0.0
    %598 = vmatprep.subr.mxu0 0.0
    %599 = vmatpush1.msra.mxu0 0.0
    %600 = vmatprep.subr.mxu0 0.0
    %601 = vmatpush1.msra.mxu0 0.0
    %602 = vmatprep.subr.mxu0 0.0
    %603 = vmatpush1.msra.mxu0 0.0
    %604 = vmatprep.subr.mxu0 0.0
    %605 = vmatpush1.msra.mxu0 0.0
    %606 = vmatprep.subr.mxu0 0.0
    %607 = vmatpush1.msra.mxu0 0.0
    %608 = vmatprep.subr.mxu0 0.0
    %609 = vmatpush1.msra.mxu0 0.0
    %610 = vmatprep.subr.mxu0 0.0
    %611 = vmatpush1.msra.mxu0 0.0
    %612 = vmatprep.subr.mxu0 0.0
    %613 = vmatpush1.msra.mxu0 0.0
    %614 = vmatprep.subr.mxu0 0.0
    %615 = vmatpush1.msra.mxu0 0.0
    %616 = vmatprep.subr.mxu0 0.0
    %617 = vmatpush1.msra.mxu0 0.0
    %618 = vmatprep.subr.mxu0 0.0
    %619 = vmatpush1.msra.mxu0 0.0
    %620 = vmatprep.subr.mxu0 0.0
    %621 = vmatpush1.msra.mxu0 0.0
    %622 = vmatprep.subr.mxu0 0.0
    %623 = vmatpush1.msra.mxu0 0.0
    %624 = vmatprep.subr.mxu0 0.0
    %625 = vmatpush1.msra.mxu0 0.0
    %626 = vmatprep.subr.mxu0 0.0
    %627 = vmatpush1.msra.mxu0 0.0
    %628 = vmatprep.subr.mxu0 0.0
    %629 = vmatpush1.msra.mxu0 0.0
    %630 = vmatprep.subr.mxu0 0.0
    %631 = vmatpush1.msra.mxu0 0.0
    %632 = vmatprep.subr.mxu0 0.0
    %633 = vmatpush1.msra.mxu0 0.0
    %634 = vmatprep.mubr.f32.mxu0 0.0
    %v635 = vand.u32 %v52, 4294901760
    %636 = vmatmul.mubr.f32.gmra.mrb[0].mxu0 %v635
    %v637 = vpop.f32.mrb[0].mxu0
    %v638 = vadd.f32 %v551, %v637
    %v639 = vpop.f32.mrb[0].mxu0
    %v640 = vadd.f32 %v553, %v639
    %641 = vmatprep.mubr.f32.mxu0 0.0
    %v642 = vand.u32 %v55, 4294901760
    %643 = vmatmul.mubr.f32.gmra.mrb[0].mxu0 %v642
    %v644 = vpop.f32.mrb[0].mxu0
    %v645 = vadd.f32 %v558, %v644
    %v646 = vpop.f32.mrb[0].mxu0
    %v647 = vadd.f32 %v560, %v646
    %648 = vdwg.mxu0
    %649 = vst [vmem:[#allocation5] sm:$0xff] %v638
    %650 = vst [vmem:[#allocation5 + $0x8] sm:$0xff] %v640
    %651 = vst [vmem:[#allocation5 + $0x10] sm:$0xff] %v645
    %652 = vst [vmem:[#allocation5 + $0x18] sm:$0xff] %v647
    // Predicated region
    $region14: #{tpu_custom_call.1} parent=1 // pred_check
      _
    $region15: #{tpu_custom_call.1} parent=1 // pred_check_branch
      %654 = sbr.rel (0) target = $region17
    $region16: #{tpu_custom_call.1} parent=1 // pred_region
      %s656 = ssub.s32 512, 512
      %657 = vsyncadd [#allocation4], %s656
      %s658 = sshll.u32 [#allocation5], 4
      %s659 = int_to_ptr.vmem [resolvable:$true] %s658
      %664 = dma.vmem_to_hbm [thread:$0]  %s659, 512, %s2, [#allocation4], 256, 256, 16
    $region17: #{tpu_custom_call.1} parent=1 // pred_fallthru
      _
    // Predicated region
    $region18: #{tpu_custom_call.1} parent=1 // pred_check
      _
    $region19: #{tpu_custom_call.1} parent=1 // pred_check_branch
      %666 = sbr.rel (0) target = $region21
    $region20: #{tpu_custom_call.1} parent=1 // pred_region
      %667 = dma.done [#allocation4], 512
    $region21: #{tpu_custom_call.1} parent=1 // pred_fallthru
      _
    %668 = vsyncpa [#allocation3], 1
    %669 = vsyncpa [#allocation4], 1

</llo_original>
